<compile_context>
chip_gen: v7x
topology: tpu7x:2x2x1
jax: 0.10.0
libtpu: 0.0.40
codegen_flags: <defaults>
</compile_context>

<pallas_src>
import functools

import jax
import jax.numpy as jnp
from jax.experimental import pallas as pl
from jax.experimental.pallas import tpu as pltpu


def _awmse_partial_kernel(pred_ref, true_ref, out_ref, *, epsilon, a,
                          b_total, row_tile):
    """One (row_tile, T) tile -> (1, T) partial sum of weighted squared errors."""
    yt = true_ref[...].astype(jnp.float32)            # (R, T) cast in-kernel
    yp = pred_ref[...].astype(jnp.float32)            # (R, T)

    # amplitude per row: one lane-max per row group (unavoidable XLU work).
    amp = jnp.max(jnp.abs(yt), axis=-1, keepdims=True) + epsilon   # (R, 1)

    # Per-row factor w_half = amplitude ** (-a): one transcendental per ROW
    # instead of a divide + pow per ELEMENT.  `a` is a static Python float.
    if a == 0.0:
        w_half = jnp.ones_like(amp)
    elif a == 0.5:
        w_half = jax.lax.rsqrt(amp)                    # EUP, per row only
    elif a == 1.0:
        w_half = 1.0 / amp
    else:
        w_half = jnp.exp((-a) * jnp.log(amp))          # (R, 1)

    s = (yp - yt) * w_half                             # (R, T) VPU-only streaming
    sq = s * s                                         # (R, T)

    # Mask rows of the ragged last tile (and any garbage the partial-block DMA
    # brought in).  Static no-op when B is a multiple of row_tile.
    if b_total % row_tile != 0:
        i = pl.program_id(0)
        rows_valid = b_total - i * row_tile            # may exceed row_tile: fine
        row_ids = jax.lax.broadcasted_iota(jnp.int32, (row_tile, 1), 0)
        sq = jnp.where(row_ids < rows_valid, sq, 0.0)  # select, so NaN garbage is dropped

    # Fold rows (VPU vreg adds + one cheap sublane collapse); the cross-lane
    # collapse to a scalar is deferred to the wrapper epilogue.
    out_ref[0] = jnp.sum(sq, axis=0, keepdims=True)    # (1, T) lane-dense store


def _round_up(x, m):
    return ((x + m - 1) // m) * m


def _vmem_capacity_bytes():
    try:
        cap = int(pltpu.get_tpu_info().vmem_capacity_bytes)
    except Exception:
        cap = 64 * 1024 * 1024
    # Guard against a per-chip number on a 2-TC part; our blocks are small so
    # a conservative basis costs nothing.
    return min(cap, 128 * 1024 * 1024)


def amplitude_weighted_mse_loss(y_pred, y_true, *, epsilon, a, row_tile=None):
    """Pallas implementation of AmplitudeWeightedMSELoss.forward.

    y_pred, y_true: (B, T) arrays (T is the PyTorch dim=1 axis), any float dtype.
    Returns a scalar float32 loss.
    """
    assert y_pred.shape == y_true.shape and y_pred.ndim == 2
    B, T = y_pred.shape

    itemsize = jnp.dtype(y_true.dtype).itemsize
    # Sublane packing: f32 -> 8 rows, bf16 -> 16, int8/fp8 -> 32.
    sublane = max(8, 32 // max(itemsize, 1))

    # ---- tile sizing: ~3 MiB input blocks hit the HBM roofline plateau ------
    if row_tile is None:
        target_block_bytes = 3 << 20
        row_tile = target_block_bytes // max(T * itemsize, 1)
    row_tile = max(sublane, (row_tile // sublane) * sublane)
    row_tile = min(row_tile, _round_up(B, sublane))

    # Guarantee >= 2 grid tiles when possible so both v7x TensorCores get work.
    if pl.cdiv(B, row_tile) == 1 and B > sublane:
        row_tile = max(sublane, _round_up(pl.cdiv(B, 2), sublane))

    num_tiles = pl.cdiv(B, row_tile)

    # ---- VMEM budget: double-buffered native inputs + f32 temporaries -------
    in_block_bytes = row_tile * T * itemsize
    f32_block_bytes = row_tile * T * 4
    vmem_needed = (4 * in_block_bytes        # 2 inputs x 2 pipeline buffers
                   + 4 * f32_block_bytes     # casts + scaled error + square
                   + 2 * T * 4               # (1, T) output, double buffered
                   + (2 << 20))              # Mosaic internal scratch slack
    vmem_cap = _vmem_capacity_bytes()
    vmem_limit = min(max(vmem_needed, 16 << 20), int(vmem_cap * 0.9))

    kernel = functools.partial(
        _awmse_partial_kernel,
        epsilon=float(epsilon), a=float(a), b_total=B, row_tile=row_tile,
    )

    partials = pl.pallas_call(
        kernel,
        out_shape=jax.ShapeDtypeStruct((num_tiles, 1, T), jnp.float32),
        grid_spec=pltpu.PrefetchScalarGridSpec(
            num_scalar_prefetch=0,
            grid=(num_tiles,),
            in_specs=[
                pl.BlockSpec((row_tile, T), lambda i: (i, 0)),
                pl.BlockSpec((row_tile, T), lambda i: (i, 0)),
            ],
            out_specs=pl.BlockSpec((1, 1, T), lambda i: (i, 0, 0)),
        ),
        compiler_params=pltpu.CompilerParams(
            dimension_semantics=("parallel",),   # independent tiles -> both TCs on v7x
            vmem_limit_bytes=int(vmem_limit),
        ),
    )(y_pred, y_true)

    # Tiny final combine (num_tiles * T values) + mean over the TRUE element count.
    return jnp.sum(partials) / jnp.float32(B * T)


def _reference(y_pred, y_true, epsilon, a):
    amp = jnp.max(jnp.abs(y_true), axis=1, keepdims=True) + epsilon
    ne = (y_pred - y_true) / amp ** a
    return jnp.mean(ne ** 2)


if __name__ == "__main__":
    epsilon = 1e-6
    a = 0.5

    key = jax.random.PRNGKey(0)
    k1, k2, k3, k4, k5, k6 = jax.random.split(key, 6)

    # Primary check: (batch, time) matching the module's dim=1 reduction axis.
    B, T = 16, 256
    y_true = jax.random.normal(k1, (B, T), dtype=jnp.float32)
    y_pred = y_true + 0.1 * jax.random.normal(k2, (B, T), dtype=jnp.float32)
    loss = jax.block_until_ready(
        amplitude_weighted_mse_loss(y_pred, y_true, epsilon=epsilon, a=a)
    )
    ref = jax.block_until_ready(_reference(y_pred, y_true, epsilon, a))
    assert jnp.allclose(loss, ref, rtol=1e-5, atol=1e-6), (loss, ref)

    # Ragged batch / non-multiple-of-128 time axis exercises the masked last tile.
    B2, T2 = 13, 200
    y_true2 = jax.random.normal(k3, (B2, T2), dtype=jnp.float32)
    y_pred2 = y_true2 + 0.1 * jax.random.normal(k4, (B2, T2), dtype=jnp.float32)
    loss2 = jax.block_until_ready(
        amplitude_weighted_mse_loss(y_pred2, y_true2, epsilon=epsilon, a=a)
    )
    ref2 = jax.block_until_ready(_reference(y_pred2, y_true2, epsilon, a))
    assert jnp.allclose(loss2, ref2, rtol=1e-5, atol=1e-6), (loss2, ref2)

    # bf16 inputs streamed natively (in-kernel cast, 16-row sublane alignment).
    B3, T3 = 10, 128
    y_true3 = jax.random.normal(k5, (B3, T3), dtype=jnp.bfloat16)
    y_pred3 = (y_true3.astype(jnp.float32)
               + 0.1 * jax.random.normal(k6, (B3, T3), dtype=jnp.float32)
               ).astype(jnp.bfloat16)
    loss3 = jax.block_until_ready(
        amplitude_weighted_mse_loss(y_pred3, y_true3, epsilon=epsilon, a=a)
    )
    ref3 = jax.block_until_ready(
        _reference(y_pred3.astype(jnp.float32), y_true3.astype(jnp.float32),
                   epsilon, a)
    )
    assert jnp.allclose(loss3, ref3, rtol=1e-4, atol=1e-5), (loss3, ref3)

    print("KERNEL_OK")
</pallas_src>

<mosaic_0001>
module attributes {stable_mosaic.version = 11 : i64} {
  func.func @_awmse_partial_kernel(%arg0: i32, %arg1: memref<8x256xf32, #tpu.memory_space<vmem>>, %arg2: memref<8x256xf32, #tpu.memory_space<vmem>>, %arg3: memref<1x1x256xf32, #tpu.memory_space<vmem>>) attributes {dimension_semantics = [#tpu.dimension_semantics<parallel>], iteration_bounds = array<i64: 2>, scalar_prefetch = 0 : i64, scratch_operands = 0 : i64, tpu.core_type = #tpu.core_type<tc>, window_params = [{transform_indices = @transform_0, window_bounds = array<i64: 8, 256>}, {transform_indices = @transform_1, window_bounds = array<i64: 8, 256>}, {transform_indices = @transform_2, window_bounds = array<i64: 1, 1, 256>}]} {
    %c0 = arith.constant 0 : index
    %c0_0 = arith.constant 0 : index
    %0 = vector.load %arg2[%c0, %c0_0] : memref<8x256xf32, #tpu.memory_space<vmem>>, vector<8x256xf32>
    %c0_1 = arith.constant 0 : index
    %c0_2 = arith.constant 0 : index
    %1 = vector.load %arg1[%c0_1, %c0_2] : memref<8x256xf32, #tpu.memory_space<vmem>>, vector<8x256xf32>
    %2 = math.absf %0 : vector<8x256xf32>
    %cst = arith.constant dense<0xFF800000> : vector<8xf32>
    %3 = vector.multi_reduction <maximumf>, %2, %cst [1] : vector<8x256xf32> to vector<8xf32>
    %4 = vector.shape_cast %3 : vector<8xf32> to vector<8x1xf32>
    %cst_3 = arith.constant 9.99999997E-7 : f32
    %5 = vector.broadcast %cst_3 : f32 to vector<8x1xf32>
    %6 = arith.addf %4, %5 : vector<8x1xf32>
    %7 = math.rsqrt %6 : vector<8x1xf32>
    %8 = arith.subf %1, %0 : vector<8x256xf32>
    %9 = vector.broadcast %7 : vector<8x1xf32> to vector<8x256xf32>
    %10 = arith.mulf %8, %9 : vector<8x256xf32>
    %11 = arith.mulf %10, %10 : vector<8x256xf32>
    %cst_4 = arith.constant dense<0.000000e+00> : vector<256xf32>
    %12 = vector.multi_reduction <add>, %11, %cst_4 [0] : vector<8x256xf32> to vector<256xf32>
    %13 = vector.shape_cast %12 : vector<256xf32> to vector<1x256xf32>
    %c0_5 = arith.constant 0 : index
    %c0_6 = arith.constant 0 : index
    %c0_7 = arith.constant 0 : index
    %14 = vector.load %arg3[%c0_5, %c0_6, %c0_7] : memref<1x1x256xf32, #tpu.memory_space<vmem>>, vector<1x1x256xf32>
    %15 = vector.shape_cast %14 : vector<1x1x256xf32> to vector<1x256xf32>
    %16 = vector.shape_cast %13 : vector<1x256xf32> to vector<1x1x256xf32>
    tpu.vector_store %arg3[%c0_5, %c0_6, %c0_7], %16 {strides = array<i32>} : memref<1x1x256xf32, #tpu.memory_space<vmem>>, vector<1x1x256xf32>,
    return
  }
  func.func @transform_0(%arg0: i32) -> (i32, i32) {
    %c0_i32 = arith.constant 0 : i32
    %c0_i32_0 = arith.constant 0 : i32
    return %arg0, %c0_i32 : i32, i32
  }
  func.func @transform_1(%arg0: i32) -> (i32, i32) {
    %c0_i32 = arith.constant 0 : i32
    %c0_i32_0 = arith.constant 0 : i32
    return %arg0, %c0_i32 : i32, i32
  }
  func.func @transform_2(%arg0: i32) -> (i32, i32, i32) {
    %c0_i32 = arith.constant 0 : i32
    %c0_i32_0 = arith.constant 0 : i32
    %c0_i32_1 = arith.constant 0 : i32
    return %arg0, %c0_i32, %c0_i32_0 : i32, i32, i32
  }
}

</mosaic_0001>

<llo_original>
// kernel: tpu_custom_call.1
$region0: #{tpu_custom_call.1}
  #allocation0 [shape = 'u32[]', space=smem, size = 0x4, offset = 0x4, fixed_abs, tag = 'smem constant byte address 0x4 - core index']
  #allocation1 [shape = 'u32[144,128]{1,0:T(1,128)}', space=vmem, size = 0x12000, scoped, tag = 'internal scratch']
  %s0 = inlined_call_operand.hbm [shape: f32[16,256], index: 0, kind: input, shape index: {}]
  %s1 = inlined_call_operand.hbm [shape: f32[16,256], index: 1, kind: input, shape index: {}]
  %s2 = inlined_call_operand.hbm [shape: f32[2,1,256], index: 2, kind: output, shape index: {}]
  %s3 = sld [smem:[#allocation0]]
  $region49: #{tpu_custom_call.1} parent=0
    _
  %s5 = ssub.s32 1, %s3
  %s6 = scalar_select 0, %s5, %s3
  $region1: #{tpu_custom_call.1} parent=0
    #allocation2 [shape = 'u8[16384]{0}', space=vmem, size = 0x4000, scoped, tag = 'input window, operand 0']
    #allocation3 [shape = 's32[2]{0}', space=sflag, size = 0x8, scoped, tag = 'scoped memory for tpu_custom_call.1']
    #allocation4 [shape = 's32[2]{0}', space=sflag, size = 0x8, scoped, tag = 'scoped memory for tpu_custom_call.1']
    #allocation5 [shape = 'u8[16384]{0}', space=vmem, size = 0x4000, scoped, tag = 'input window, operand 1']
    #allocation6 [shape = 's32[2]{0}', space=sflag, size = 0x8, scoped, tag = 'scoped memory for tpu_custom_call.1']
    #allocation7 [shape = 'u8[2048]{0}', space=vmem, size = 0x800, scoped, tag = 'output window, operand 0']
    %7 = vsyncpa [#allocation3], 0
    %s8 = scalar_lea.sflag [#allocation3], 1
    %9 = vsyncpa %s8, 0
    %10 = vsyncpa [#allocation6], 0
    %s11 = scalar_lea.sflag [#allocation6], 1
    %12 = vsyncpa %s11, 0
    %13 = vsyncpa [#allocation4], 0
    %s14 = scalar_lea.sflag [#allocation4], 1
    %15 = vsyncpa %s14, 0
    loop: start=0, step=1, limit=4
    $region2: #{tpu_custom_call.1} parent=1 // loop_pre_header
      _
    $region3: #{tpu_custom_call.1} parent=1 // loop_header
      %s17 = sphi 0, %s21
      %p18 = scmp.ge.s32.totalorder %s17, 4
      %s27 = sphi 0, %s29
      %s30 = sphi 0, %s27
      %s31 = sphi 0, %s30
      %s47 = sphi 0, %s31
      %s53 = sphi 0, %s55
      %s56 = sphi 0, %s53
      %s57 = sphi 0, %s56
      %s73 = sphi 0, %s57
      %s79 = sphi 0, %s81
      %s82 = sphi 0, %s79
      %s83 = sphi 0, %s82
      %s99 = sphi 0, %s83
    $region4: #{tpu_custom_call.1} parent=1 // loop_header_branch
      %20 = sbr.rel (%p18) target = $region8
    $region5: #{tpu_custom_call.1} parent=1 // loop_body
      %s22 = ssub.s32 %s17, 1
      %s23 = ssub.s32 %s17, 2
      %s24 = sadd.s32 %s17, 1
      %s25 = ssub.s32 %s17, %s24
      %p26 = scmp.eq.s32.totalorder %s25, 0
      %s28 = sadd.s32 %s27, 1
      %s29 = scalar_select %p26, %s27, %s28
      %p32 = pneg %p26
      %p33 = scmp.eq.s32.totalorder %s17, 1
      %p34 = por %p32, %p33
      %p35 = scmp.ne.s32.totalorder %s27, %s30
      %p36 = scmp.eq.s32.totalorder %s17, 0
      %p37 = por %p35, %p36
      %p38 = scmp.ne.s32.totalorder %s27, %s30
      %p39 = scmp.eq.s32.totalorder %s22, 1
      %p40 = por %p38, %p39
      %p41 = scmp.ne.s32.totalorder %s30, %s31
      %p42 = scmp.eq.s32.totalorder %s22, 0
      %p43 = por %p41, %p42
      %p44 = scmp.ne.s32.totalorder %s30, %s31
      %p45 = scmp.eq.s32.totalorder %s23, 1
      %p46 = por %p44, %p45
      %p48 = scmp.ne.s32.totalorder %s31, %s47
      %p49 = scmp.eq.s32.totalorder %s23, 0
      %p50 = por %p48, %p49
      %s51 = ssub.s32 %s17, %s24
      %p52 = scmp.eq.s32.totalorder %s51, 0
      %s54 = sadd.s32 %s53, 1
      %s55 = scalar_select %p52, %s53, %s54
      %p58 = pneg %p52
      %p59 = scmp.eq.s32.totalorder %s17, 1
      %p60 = por %p58, %p59
      %p61 = scmp.ne.s32.totalorder %s53, %s56
      %p62 = scmp.eq.s32.totalorder %s17, 0
      %p63 = por %p61, %p62
      %p64 = scmp.ne.s32.totalorder %s53, %s56
      %p65 = scmp.eq.s32.totalorder %s22, 1
      %p66 = por %p64, %p65
      %p67 = scmp.ne.s32.totalorder %s56, %s57
      %p68 = scmp.eq.s32.totalorder %s22, 0
      %p69 = por %p67, %p68
      %p70 = scmp.ne.s32.totalorder %s56, %s57
      %p71 = scmp.eq.s32.totalorder %s23, 1
      %p72 = por %p70, %p71
      %p74 = scmp.ne.s32.totalorder %s57, %s73
      %p75 = scmp.eq.s32.totalorder %s23, 0
      %p76 = por %p74, %p75
      %s77 = ssub.s32 %s17, %s24
      %p78 = scmp.eq.s32.totalorder %s77, 0
      %s80 = sadd.s32 %s79, 1
      %s81 = scalar_select %p78, %s79, %s80
      %p84 = pneg %p78
      %p85 = scmp.eq.s32.totalorder %s17, 1
      %p86 = por %p84, %p85
      %p87 = scmp.ne.s32.totalorder %s79, %s82
      %p88 = scmp.eq.s32.totalorder %s17, 0
      %p89 = por %p87, %p88
      %p90 = scmp.ne.s32.totalorder %s79, %s82
      %p91 = scmp.eq.s32.totalorder %s22, 1
      %p92 = por %p90, %p91
      %p93 = scmp.ne.s32.totalorder %s82, %s83
      %p94 = scmp.eq.s32.totalorder %s22, 0
      %p95 = por %p93, %p94
      %p96 = scmp.ne.s32.totalorder %s82, %s83
      %p97 = scmp.eq.s32.totalorder %s23, 1
      %p98 = por %p96, %p97
      %p100 = scmp.ne.s32.totalorder %s83, %s99
      %p101 = scmp.eq.s32.totalorder %s23, 0
      %p102 = por %p100, %p101
      %p103 = scmp.le.s32.totalorder 1, %s17
      %p104 = scmp.lt.s32.totalorder %s17, 3
      %p105 = pnand %p103, %p104
      %p106 = pneg %p105
      // Predicated region
      $region9: #{tpu_custom_call.1} parent=5 // pred_check
        _
      $region10: #{tpu_custom_call.1} parent=5 // pred_check_branch
        %108 = sbr.rel (%p105) target = $region12
      $region11: #{tpu_custom_call.1} parent=5 // pred_region
        %s109 = ssub.s32 %s17, 1
      $region12: #{tpu_custom_call.1} parent=5 // pred_fallthru
        _
      %p110 = scmp.lt.s32.totalorder %s17, 2
      // Predicated region
      $region13: #{tpu_custom_call.1} parent=5 // pred_check
        %p111 = pneg %p110
      $region14: #{tpu_custom_call.1} parent=5 // pred_check_branch
        %113 = sbr.rel (%p111) target = $region16
      $region15: #{tpu_custom_call.1} parent=5 // pred_region
        // Predicated region
        $region17: #{tpu_custom_call.1} parent=15 // pred_check
          %p114 = pneg %p37
        $region18: #{tpu_custom_call.1} parent=15 // pred_check_branch
          %116 = sbr.rel (%p114) target = $region20
        $region19: #{tpu_custom_call.1} parent=15 // pred_region
          %s117 = sand.u32 %s27, 1
          %s118 = scalar_lea.sflag [#allocation3], %s117
          %s119 = sand.u32 %s27, 1
          %s120 = smul.addr %s119, 16
          %s121 = scalar_lea.vmem [#allocation2], %s120
          %s123 = ssub.s32 256, 256
          %124 = vsyncadd %s118, %s123
          %s125 = smul.addr %s17, 2
          %s126 = smul.addr %s125, 128
          %s127 = scalar_lea.hbm %s0, %s126
          %s129 = sshll.u32 %s121, 4
          %s130 = int_to_ptr.vmem [resolvable:$true] %s129
          %132 = dma.hbm_to_vmem [thread:$0]  %s127, 256, %s130, %s118
        $region20: #{tpu_custom_call.1} parent=15 // pred_fallthru
          _
        // Predicated region
        $region21: #{tpu_custom_call.1} parent=15 // pred_check
          %p133 = pneg %p63
        $region22: #{tpu_custom_call.1} parent=15 // pred_check_branch
          %135 = sbr.rel (%p133) target = $region24
        $region23: #{tpu_custom_call.1} parent=15 // pred_region
          %s136 = sand.u32 %s53, 1
          %s137 = scalar_lea.sflag [#allocation6], %s136
          %s138 = sand.u32 %s53, 1
          %s139 = smul.addr %s138, 16
          %s140 = scalar_lea.vmem [#allocation5], %s139
          %s142 = ssub.s32 256, 256
          %143 = vsyncadd %s137, %s142
          %s144 = smul.addr %s17, 2
          %s145 = smul.addr %s144, 128
          %s146 = scalar_lea.hbm %s1, %s145
          %s148 = sshll.u32 %s140, 4
          %s149 = int_to_ptr.vmem [resolvable:$true] %s148
          %151 = dma.hbm_to_vmem [thread:$0]  %s146, 256, %s149, %s137
        $region24: #{tpu_custom_call.1} parent=15 // pred_fallthru
          _
      $region16: #{tpu_custom_call.1} parent=5 // pred_fallthru
        _
      %p152 = scmp.le.s32.totalorder 1, %s17
      %p153 = scmp.lt.s32.totalorder %s17, 3
      %p154 = pnand %p152, %p153
      %p155 = pneg %p154
      // Predicated region
      $region25: #{tpu_custom_call.1} parent=5 // pred_check
        _
      $region26: #{tpu_custom_call.1} parent=5 // pred_check_branch
        %157 = sbr.rel (%p154) target = $region28
      $region27: #{tpu_custom_call.1} parent=5 // pred_region
        %s158 = ssub.s32 %s17, 1
        %s159 = sand.u32 %s30, 1
        %s160 = scalar_lea.sflag [#allocation3], %s159
        %s161 = sand.u32 %s30, 1
        %s162 = smul.addr %s161, 16
        %s163 = scalar_lea.vmem [#allocation2], %s162
        // Predicated region
        $region29: #{tpu_custom_call.1} parent=27 // pred_check
          %p164 = pneg %p43
        $region30: #{tpu_custom_call.1} parent=27 // pred_check_branch
          %166 = sbr.rel (%p164) target = $region32
        $region31: #{tpu_custom_call.1} parent=27 // pred_region
          %167 = dma.done %s160, 256
        $region32: #{tpu_custom_call.1} parent=27 // pred_fallthru
          _
        %s168 = sand.u32 %s56, 1
        %s169 = scalar_lea.sflag [#allocation6], %s168
        %s170 = sand.u32 %s56, 1
        %s171 = smul.addr %s170, 16
        %s172 = scalar_lea.vmem [#allocation5], %s171
        // Predicated region
        $region33: #{tpu_custom_call.1} parent=27 // pred_check
          %p173 = pneg %p69
        $region34: #{tpu_custom_call.1} parent=27 // pred_check_branch
          %175 = sbr.rel (%p173) target = $region36
        $region35: #{tpu_custom_call.1} parent=27 // pred_region
          %176 = dma.done %s169, 256
        $region36: #{tpu_custom_call.1} parent=27 // pred_fallthru
          _
        %s177 = sand.u32 %s30, 1
        %s178 = scalar_lea.sflag [#allocation3], %s177
        %s179 = sand.u32 %s30, 1
        %s180 = smul.addr %s179, 16
        %s181 = scalar_lea.vmem [#allocation2], %s180
        %p182 = pneg %p43
        %p183 = pneg %p40
        %s184 = sand.u32 %s56, 1
        %s185 = scalar_lea.sflag [#allocation6], %s184
        %s186 = sand.u32 %s56, 1
        %s187 = smul.addr %s186, 16
        %s188 = scalar_lea.vmem [#allocation5], %s187
        %p189 = pneg %p69
        %p190 = pneg %p66
        %p191 = pneg %p95
        %p192 = pneg %p92
        %s193 = sand.u32 %s82, 1
        %s194 = scalar_lea.sflag [#allocation4], %s193
        %s195 = sand.u32 %s82, 1
        %s196 = smul.addr %s195, 2
        %s197 = scalar_lea.vmem [#allocation7], %s196
        %v198 = vld [vmem:[%s172] sm:$0xff]
        %v199 = vld [vmem:[%s172 + $0x8] sm:$0xff]
        %v200 = vld [vmem:[%s163] sm:$0xff]
        %v201 = vld [vmem:[%s163 + $0x8] sm:$0xff]
        %v202 = vand.u32 2147483647, %v198
        %v203 = vand.u32 2147483647, %v199
        %v204 = vmax.f32 %v202, %v203
        %205 = vmax.xlane.f32.xlu0 %v204
        %v206 = vpop.xlane.xlu0 %205
        %v207 = vadd.f32 %v206, 1e-06
        %v208 = vrsqrt.pop %v207
        %v209 = vsub.f32 %v200, %v198
        %v210 = vsub.f32 %v201, %v199
        %v211 = vmul.f32 %v209, %v208
        %v212 = vmul.f32 %v210, %v208
        %v213 = vmul.f32 %v211, %v211
        %v214 = vmul.f32 %v212, %v212
        %v215 = vrot.slane %v213, 4
        %v216 = vadd.f32 %v213, %v215
        %v217 = vrot.slane %v216, 2
        %v218 = vadd.f32 %v216, %v217
        %v219 = vrot.slane %v218, 1
        %v220 = vadd.f32 %v218, %v219
        %v221 = vrot.slane %v214, 4
        %v222 = vadd.f32 %v214, %v221
        %v223 = vrot.slane %v222, 2
        %v224 = vadd.f32 %v222, %v223
        %v225 = vrot.slane %v224, 1
        %v226 = vadd.f32 %v224, %v225
        %v229 = vcombine.low %v220, %v226
        %v231 = vunpack.c.l.s4 1966171168
        %v232 = vunpack.c.0.s8 %v231
        %v233 = vlaneseq
        %v234 = vshrl.u32 %v233, 7
        %v235 = vsub.s32 %v232, %v234
        %v236 = vrot.slane %v229, %v235
        %v238 = vunpack.c.l.s4 1966171168
        %v239 = vunpack.c.0.s8 %v238
        %v240 = vlaneseq
        %v241 = vshrl.u32 %v240, 7
        %v242 = vsub.s32 %v239, %v241
        %v243 = vrot.slane %v236, %v242
        %v245 = vlaneseq
        %vm246 = vcmp.ge.s32.totalorder %v245, 0
        %vm247 = vcmp.lt.s32.totalorder %v245, 256
        %vm248 = vmand %vm246, %vm247
        %249 = vst.msk [vmem:[%s197] sm:$0x3] %vm248, %v243
        %s250 = sand.u32 %s82, 1
        %s251 = scalar_lea.sflag [#allocation4], %s250
        %s252 = sand.u32 %s82, 1
        %s253 = smul.addr %s252, 2
        %s254 = scalar_lea.vmem [#allocation7], %s253
        // Predicated region
        $region37: #{tpu_custom_call.1} parent=27 // pred_check
          %p255 = pneg %p92
        $region38: #{tpu_custom_call.1} parent=27 // pred_check_branch
          %257 = sbr.rel (%p255) target = $region40
        $region39: #{tpu_custom_call.1} parent=27 // pred_region
          %s259 = ssub.s32 32, 32
          %260 = vsyncadd %s251, %s259
          %s261 = smul.addr %s22, 2
          %s262 = smul.addr %s261, 16
          %s263 = scalar_lea.hbm %s2, %s262
          %s265 = sshll.u32 %s254, 4
          %s266 = int_to_ptr.vmem [resolvable:$true] %s265
          %268 = dma.vmem_to_hbm [thread:$0]  %s266, 32, %s263, %s251
        $region40: #{tpu_custom_call.1} parent=27 // pred_fallthru
          _
      $region28: #{tpu_custom_call.1} parent=5 // pred_fallthru
        _
      %p269 = scmp.le.s32.totalorder 2, %s17
      // Predicated region
      $region41: #{tpu_custom_call.1} parent=5 // pred_check
        %p270 = pneg %p269
      $region42: #{tpu_custom_call.1} parent=5 // pred_check_branch
        %272 = sbr.rel (%p270) target = $region44
      $region43: #{tpu_custom_call.1} parent=5 // pred_region
        %s273 = ssub.s32 %s17, 2
        // Predicated region
        $region45: #{tpu_custom_call.1} parent=43 // pred_check
          %p274 = pneg %p98
        $region46: #{tpu_custom_call.1} parent=43 // pred_check_branch
          %276 = sbr.rel (%p274) target = $region48
        $region47: #{tpu_custom_call.1} parent=43 // pred_region
          %s277 = sand.u32 %s83, 1
          %s278 = scalar_lea.sflag [#allocation4], %s277
          %s279 = sand.u32 %s83, 1
          %s280 = smul.addr %s279, 2
          %s281 = scalar_lea.vmem [#allocation7], %s280
          %282 = dma.done %s278, 32
        $region48: #{tpu_custom_call.1} parent=43 // pred_fallthru
          _
      $region44: #{tpu_custom_call.1} parent=5 // pred_fallthru
        _
    $region6: #{tpu_custom_call.1} parent=1 // loop_footer
      %s21 = sadd.s32 1, %s17
    $region7: #{tpu_custom_call.1} parent=1 // loop_footer_branch
      %16 = sbr.rel target = $region3
    $region8: #{tpu_custom_call.1} parent=1 // loop_exit
      _
    %283 = vsyncpa [#allocation3], 1
    %s284 = scalar_lea.sflag [#allocation3], 1
    %285 = vsyncpa %s284, 1
    %286 = vsyncpa [#allocation6], 1
    %s287 = scalar_lea.sflag [#allocation6], 1
    %288 = vsyncpa %s287, 1
    %289 = vsyncpa [#allocation4], 1
    %s290 = scalar_lea.sflag [#allocation4], 1
    %291 = vsyncpa %s290, 1

</llo_original>
